<compile_context>
chip_gen: v7x
topology: tpu7x:2x2x1
jax: 0.10.0
libtpu: 0.0.40
codegen_flags: <defaults>
</compile_context>

<pallas_src>
import math
from itertools import permutations

import numpy as np
import jax
import jax.numpy as jnp
from jax.experimental import pallas as pl
from jax.experimental.pallas import tpu as pltpu

try:
    from scipy.optimize import linear_sum_assignment as _scipy_lsa
except Exception:  # pragma: no cover
    _scipy_lsa = None

_EPS = 1e-6
_BLOCK_BYTES_CAP = 4 * 1024 * 1024  # per-step f32 output block cap (safe on v5e/v6e/v7x scoped VMEM)


def _round_up(x, m):
    return ((x + m - 1) // m) * m


def _make_cost_kernel(cost_span_w, neg_giou_w):
    """cost_span_w = w_span, neg_giou_w = -w_giou (sign folded into the constant)."""

    def kernel(cls_ref, ocx_ref, ow_ref, tcx_ref, tw_ref, cost_ref):
        # predictions on sublanes, targets on lanes; all cross terms are (TQ,1)x(1,M) broadcasts.
        cls_term = cls_ref[...].astype(jnp.float32)   # (1, TQ, 1) == -w_class * softmax[:, fg]
        o_cx = ocx_ref[...].astype(jnp.float32)       # (1, TQ, 1)
        o_w = ow_ref[...].astype(jnp.float32)         # (1, TQ, 1)
        t_cx = tcx_ref[...].astype(jnp.float32)       # (1, 1,  M)
        t_w = tw_ref[...].astype(jnp.float32)         # (1, 1,  M)

        # ----- span L1 cost (torch.cdist p=1 over the 2-d (cx, w) coords) -----
        cost_span = jnp.abs(o_cx - t_cx) + jnp.abs(o_w - t_w)          # (1, TQ, M)

        # ----- generalized temporal IoU on (cx, w) -> (start, end); narrow precompute -----
        o_s = o_cx - 0.5 * o_w                                          # narrow (1,TQ,1)
        o_e = o_cx + 0.5 * o_w
        t_s = t_cx - 0.5 * t_w                                          # narrow (1,1,M)
        t_e = t_cx + 0.5 * t_w
        inter = jnp.maximum(jnp.minimum(o_e, t_e) - jnp.maximum(o_s, t_s), 0.0)
        union = (o_w + t_w) - inter                                     # widths ARE the areas
        enclose = jnp.maximum(o_e, t_e) - jnp.minimum(o_s, t_s)         # >= 0 for w >= 0 (no clamp, as reference)
        inv_union = pl.reciprocal(union + _EPS, approx=True)            # EUP slot, ~free
        inv_enclose = pl.reciprocal(enclose + _EPS, approx=True)
        iou = inter * inv_union
        giou = iou - (enclose - union) * inv_enclose

        cost_ref[...] = cost_span_w * cost_span + neg_giou_w * giou + cls_term

    return kernel


def hungarian_cost_blocks(pred_logits, pred_spans, t_cx_pad, t_w_pad, *,
                          cost_class=1.0, cost_span=1.0, cost_giou=1.0,
                          foreground_label=0):
    """Per-batch block-diagonal cost.

    Args:
      pred_logits: (bs, nq, num_classes)
      pred_spans : (bs, nq, 2) in (cx, w)
      t_cx_pad   : (bs, 1, M_pad) per-batch target centers, padded (M_pad multiple of 128)
      t_w_pad    : (bs, 1, M_pad) per-batch target widths, padded
    Returns:
      (bs, nq_pad, M_pad) float32. Rows >= nq and columns >= the true per-batch target count
      are padding; the caller slices them off on host (numpy), never on device.
    """
    bs, nq, _ = pred_logits.shape
    M_pad = int(t_cx_pad.shape[-1])
    assert M_pad % 128 == 0

    # Query tile: multiple of 8, output block capped at ~4 MiB f32 so double-buffering fits
    # the scoped-VMEM defaults (v5e 16 MiB, v7x 32 MiB-of-64).
    tq_cap = max(8, ((_BLOCK_BYTES_CAP // (M_pad * 4)) // 8) * 8)
    tq = min(_round_up(nq, 8), tq_cap)
    nq_pad = _round_up(nq, tq)

    # Hoisted softmax with class weight & sign folded in (narrow per-prediction term).
    prob_fg = jax.nn.softmax(pred_logits.astype(jnp.float32), axis=-1)[..., foreground_label]
    class_term = (-float(cost_class)) * prob_fg                     # (bs, nq)
    o_cx = pred_spans[..., 0].astype(jnp.float32)
    o_w = pred_spans[..., 1].astype(jnp.float32)

    pad_q = nq_pad - nq  # padded query rows get benign finite values; sliced off on host
    class_term = jnp.pad(class_term, ((0, 0), (0, pad_q)))[..., None]          # (bs, nq_pad, 1)
    o_cx = jnp.pad(o_cx, ((0, 0), (0, pad_q)), constant_values=0.5)[..., None]
    o_w = jnp.pad(o_w, ((0, 0), (0, pad_q)), constant_values=1.0)[..., None]

    kernel = _make_cost_kernel(float(cost_span), -float(cost_giou))
    pred_spec = pl.BlockSpec((1, tq, 1), lambda b, i: (b, i, 0))
    tgt_spec = pl.BlockSpec((1, 1, M_pad), lambda b, i: (b, 0, 0))   # constant across i -> stays resident

    return pl.pallas_call(
        kernel,
        out_shape=jax.ShapeDtypeStruct((bs, nq_pad, M_pad), jnp.float32),
        grid=(bs, nq_pad // tq),
        in_specs=[pred_spec, pred_spec, pred_spec, tgt_spec, tgt_spec],
        out_specs=pl.BlockSpec((1, tq, M_pad), lambda b, i: (b, i, 0)),
        compiler_params=pltpu.CompilerParams(
            dimension_semantics=("parallel", "parallel"),   # megacore-shardable on v7x
            vmem_limit_bytes=32 * 1024 * 1024),
    )(class_term, o_cx, o_w, t_cx_pad, t_w_pad)


def _pad_targets_np(span_list, m_pad):
    """Stack per-batch targets into (bs, 1, m_pad) cx / w arrays with benign padding."""
    bs = len(span_list)
    t_cx = np.full((bs, 1, m_pad), 0.5, np.float32)
    t_w = np.full((bs, 1, m_pad), 1.0, np.float32)
    for i, s in enumerate(span_list):
        s_np = np.asarray(s, dtype=np.float32)
        n = s_np.shape[0]
        if n:
            t_cx[i, 0, :n] = s_np[:, 0]
            t_w[i, 0, :n] = s_np[:, 1]
    return jnp.asarray(t_cx), jnp.asarray(t_w)


def _brute_force_assignment(c):
    """Exact assignment for a tiny cost matrix (nq x nt, nt <= nq). Fallback if scipy is absent."""
    c = np.asarray(c, dtype=np.float64)
    nq, nt = c.shape
    assert nt <= nq and nt <= 8, "brute-force fallback is only for tiny unit-test sizes"
    best, best_cost = None, math.inf
    for perm in permutations(range(nq), nt):
        cost = 0.0
        for j in range(nt):
            cost += c[perm[j], j]
        if cost < best_cost:
            best_cost, best = cost, perm
    pairs = sorted(zip(best, range(nt)))
    rows = np.array([p[0] for p in pairs], dtype=np.int64)
    cols = np.array([p[1] for p in pairs], dtype=np.int64)
    return rows, cols


def _linear_sum_assignment(c):
    if _scipy_lsa is not None:
        r, col = _scipy_lsa(np.asarray(c))
        return np.asarray(r, dtype=np.int64), np.asarray(col, dtype=np.int64)
    return _brute_force_assignment(c)


class HungarianMatcher:
    """JAX/Pallas port of the default (non-cc_matching, span_loss_type='l1') path."""

    def __init__(self, cost_class=1.0, cost_span=1.0, cost_giou=1.0,
                 span_loss_type='l1', max_v_l=75, num_queries=10):
        assert cost_class != 0 or cost_span != 0 or cost_giou != 0, "all costs cant be 0"
        assert span_loss_type == 'l1'
        self.cost_class = cost_class
        self.cost_span = cost_span
        self.cost_giou = cost_giou
        self.foreground_label = 0
        self.max_v_l = max_v_l
        self.num_queries = num_queries
        # TODO(synk): cc_matching / aux_pred_logits branches are Python-level list
        # bookkeeping over targets; only the default matching path is implemented.

    def __call__(self, outputs, targets):
        pred_logits = outputs["pred_logits"]                 # (bs, nq, num_classes)
        pred_spans = outputs["pred_spans"]                   # (bs, nq, 2), (cx, w)
        span_list = [t["spans"] for t in targets]            # list of (n_i, 2)
        sizes = [int(s.shape[0]) for s in span_list]
        bs, nq = pred_spans.shape[:2]

        m_max = max(sizes) if sizes else 0
        if m_max == 0:
            empty = np.zeros((0,), np.int64)
            return [(empty, empty) for _ in sizes]
        m_pad = _round_up(m_max, 128)                        # lane-dense target axis

        t_cx_pad, t_w_pad = _pad_targets_np(span_list, m_pad)

        C = hungarian_cost_blocks(
            pred_logits, pred_spans, t_cx_pad, t_w_pad,
            cost_class=self.cost_class, cost_span=self.cost_span,
            cost_giou=self.cost_giou, foreground_label=self.foreground_label)
        C_np = np.asarray(jax.block_until_ready(C))          # (bs, nq_pad, m_pad), padded

        # TODO(synk): the Hungarian assignment itself (linear_sum_assignment) is a
        # sequential data-dependent host-side algorithm with no clean Pallas equivalent.
        indices = []
        for i, n in enumerate(sizes):
            c_i = C_np[i, :nq, :n]                           # slice padding off on host, true sizes only
            indices.append(_linear_sum_assignment(c_i))
        return indices


def _reference_cost(pred_logits, pred_spans, tgt_spans, w_class, w_span, w_giou, fg):
    """Pure-numpy reference of the PyTorch cost matrix (float64), over ALL concatenated targets."""
    logits = np.asarray(pred_logits, np.float64)
    spans = np.asarray(pred_spans, np.float64).reshape(-1, 2)
    tgt = np.asarray(tgt_spans, np.float64)
    e = np.exp(logits - logits.max(-1, keepdims=True))
    prob = (e / e.sum(-1, keepdims=True)).reshape(-1, logits.shape[-1])
    cost_class = -prob[:, fg:fg + 1]
    cost_span = (np.abs(spans[:, None, 0] - tgt[None, :, 0])
                 + np.abs(spans[:, None, 1] - tgt[None, :, 1]))
    o_s = spans[:, 0:1] - 0.5 * spans[:, 1:2]
    o_e = spans[:, 0:1] + 0.5 * spans[:, 1:2]
    t_s = (tgt[:, 0] - 0.5 * tgt[:, 1])[None, :]
    t_e = (tgt[:, 0] + 0.5 * tgt[:, 1])[None, :]
    inter = np.maximum(np.minimum(o_e, t_e) - np.maximum(o_s, t_s), 0.0)
    union = (o_e - o_s) + (t_e - t_s) - inter
    iou = inter / union
    enclose = np.maximum(o_e, t_e) - np.minimum(o_s, t_s)
    giou = iou - (enclose - union) / enclose
    C = w_span * cost_span + w_giou * (-giou) + w_class * cost_class
    return C.reshape(pred_logits.shape[0], pred_logits.shape[1], -1)


if __name__ == "__main__":
    # Small deterministic example: batch=2, num_queries=8, num_classes=2 (fg/bg),
    # per-batch target counts [3, 5].
    bs, nq, nc = 2, 8, 2
    sizes = [3, 5]

    key = jax.random.PRNGKey(0)
    k1, k2, k3, k4, k5 = jax.random.split(key, 5)

    pred_logits = jax.random.normal(k1, (bs, nq, nc), dtype=jnp.float32)
    pred_cx = jax.random.uniform(k2, (bs, nq, 1), minval=0.1, maxval=0.9)
    pred_w = jax.random.uniform(k3, (bs, nq, 1), minval=0.05, maxval=0.4)
    pred_spans = jnp.concatenate([pred_cx, pred_w], axis=-1)            # (bs, nq, 2)

    tgt_cx = jax.random.uniform(k4, (sum(sizes), 1), minval=0.1, maxval=0.9)
    tgt_w = jax.random.uniform(k5, (sum(sizes), 1), minval=0.05, maxval=0.4)
    all_tgt = jnp.concatenate([tgt_cx, tgt_w], axis=-1)                 # (M, 2)
    targets = []
    off = 0
    for n in sizes:
        targets.append({"spans": all_tgt[off:off + n]})
        off += n

    matcher = HungarianMatcher(cost_class=1.0, cost_span=1.0, cost_giou=1.0,
                               num_queries=nq)
    outputs = {"pred_logits": pred_logits, "pred_spans": pred_spans}

    # Run the Pallas cost kernel once and block on the result.
    m_pad = ((max(sizes) + 127) // 128) * 128
    t_cx_pad, t_w_pad = _pad_targets_np([t["spans"] for t in targets], m_pad)
    C = hungarian_cost_blocks(pred_logits, pred_spans, t_cx_pad, t_w_pad,
                              cost_class=1.0, cost_span=1.0, cost_giou=1.0,
                              foreground_label=0)
    C = jax.block_until_ready(C)
    C_np = np.asarray(C)
    assert C_np.shape[0] == bs and C_np.shape[1] >= nq and C_np.shape[2] == m_pad
    assert np.all(np.isfinite(C_np)), "cost matrix has non-finite entries"

    # Loose numerical check of the per-batch blocks against a pure-numpy reference
    # (approx reciprocal + eps give ~1e-3-level deviations at most).
    C_ref = _reference_cost(pred_logits, pred_spans, all_tgt, 1.0, 1.0, 1.0, 0)
    offsets = np.cumsum([0] + sizes)
    for i, n in enumerate(sizes):
        blk = C_np[i, :nq, :n]
        ref = C_ref[i, :, offsets[i]:offsets[i + 1]]
        assert np.allclose(blk, ref, rtol=5e-2, atol=5e-2), "cost mismatch vs reference"

    # Full matcher (cost kernel + host-side assignment).
    indices = matcher(outputs, targets)
    for i, (row, col) in enumerate(indices):
        assert len(row) == len(col) == min(nq, sizes[i])

    print("KERNEL_OK")
</pallas_src>

<mosaic_0001>
module attributes {stable_mosaic.version = 11 : i64} {
  func.func @kernel(%arg0: i32, %arg1: i32, %arg2: memref<1x8x1xf32, #tpu.memory_space<vmem>>, %arg3: memref<1x8x1xf32, #tpu.memory_space<vmem>>, %arg4: memref<1x8x1xf32, #tpu.memory_space<vmem>>, %arg5: memref<1x1x128xf32, #tpu.memory_space<vmem>>, %arg6: memref<1x1x128xf32, #tpu.memory_space<vmem>>, %arg7: memref<1x8x128xf32, #tpu.memory_space<vmem>>) attributes {dimension_semantics = [#tpu.dimension_semantics<parallel>, #tpu.dimension_semantics<parallel>], iteration_bounds = array<i64: 2, 1>, scalar_prefetch = 0 : i64, scratch_operands = 0 : i64, tpu.core_type = #tpu.core_type<tc>, window_params = [{transform_indices = @transform_0, window_bounds = array<i64: 1, 8, 1>}, {transform_indices = @transform_1, window_bounds = array<i64: 1, 8, 1>}, {transform_indices = @transform_2, window_bounds = array<i64: 1, 8, 1>}, {transform_indices = @transform_3, window_bounds = array<i64: 1, 1, 128>}, {transform_indices = @transform_4, window_bounds = array<i64: 1, 1, 128>}, {transform_indices = @transform_5, window_bounds = array<i64: 1, 8, 128>}]} {
    %c0 = arith.constant 0 : index
    %c0_0 = arith.constant 0 : index
    %c0_1 = arith.constant 0 : index
    %0 = vector.load %arg2[%c0, %c0_0, %c0_1] : memref<1x8x1xf32, #tpu.memory_space<vmem>>, vector<1x8x1xf32>
    %c0_2 = arith.constant 0 : index
    %c0_3 = arith.constant 0 : index
    %c0_4 = arith.constant 0 : index
    %1 = vector.load %arg3[%c0_2, %c0_3, %c0_4] : memref<1x8x1xf32, #tpu.memory_space<vmem>>, vector<1x8x1xf32>
    %c0_5 = arith.constant 0 : index
    %c0_6 = arith.constant 0 : index
    %c0_7 = arith.constant 0 : index
    %2 = vector.load %arg4[%c0_5, %c0_6, %c0_7] : memref<1x8x1xf32, #tpu.memory_space<vmem>>, vector<1x8x1xf32>
    %c0_8 = arith.constant 0 : index
    %c0_9 = arith.constant 0 : index
    %c0_10 = arith.constant 0 : index
    %3 = vector.load %arg5[%c0_8, %c0_9, %c0_10] : memref<1x1x128xf32, #tpu.memory_space<vmem>>, vector<1x1x128xf32>
    %c0_11 = arith.constant 0 : index
    %c0_12 = arith.constant 0 : index
    %c0_13 = arith.constant 0 : index
    %4 = vector.load %arg6[%c0_11, %c0_12, %c0_13] : memref<1x1x128xf32, #tpu.memory_space<vmem>>, vector<1x1x128xf32>
    %5 = vector.broadcast %1 : vector<1x8x1xf32> to vector<1x8x128xf32>
    %6 = vector.broadcast %3 : vector<1x1x128xf32> to vector<1x8x128xf32>
    %7 = arith.subf %5, %6 : vector<1x8x128xf32>
    %8 = math.absf %7 : vector<1x8x128xf32>
    %9 = vector.broadcast %2 : vector<1x8x1xf32> to vector<1x8x128xf32>
    %10 = vector.broadcast %4 : vector<1x1x128xf32> to vector<1x8x128xf32>
    %11 = arith.subf %9, %10 : vector<1x8x128xf32>
    %12 = math.absf %11 : vector<1x8x128xf32>
    %13 = arith.addf %8, %12 : vector<1x8x128xf32>
    %cst = arith.constant 5.000000e-01 : f32
    %14 = vector.broadcast %cst : f32 to vector<1x8x1xf32>
    %15 = arith.mulf %14, %2 : vector<1x8x1xf32>
    %16 = arith.subf %1, %15 : vector<1x8x1xf32>
    %cst_14 = arith.constant 5.000000e-01 : f32
    %17 = vector.broadcast %cst_14 : f32 to vector<1x8x1xf32>
    %18 = arith.mulf %17, %2 : vector<1x8x1xf32>
    %19 = arith.addf %1, %18 : vector<1x8x1xf32>
    %cst_15 = arith.constant 5.000000e-01 : f32
    %20 = vector.broadcast %cst_15 : f32 to vector<1x1x128xf32>
    %21 = arith.mulf %20, %4 : vector<1x1x128xf32>
    %22 = arith.subf %3, %21 : vector<1x1x128xf32>
    %cst_16 = arith.constant 5.000000e-01 : f32
    %23 = vector.broadcast %cst_16 : f32 to vector<1x1x128xf32>
    %24 = arith.mulf %23, %4 : vector<1x1x128xf32>
    %25 = arith.addf %3, %24 : vector<1x1x128xf32>
    %26 = vector.broadcast %19 : vector<1x8x1xf32> to vector<1x8x128xf32>
    %27 = vector.broadcast %25 : vector<1x1x128xf32> to vector<1x8x128xf32>
    %28 = arith.minimumf %26, %27 : vector<1x8x128xf32>
    %29 = vector.broadcast %16 : vector<1x8x1xf32> to vector<1x8x128xf32>
    %30 = vector.broadcast %22 : vector<1x1x128xf32> to vector<1x8x128xf32>
    %31 = arith.maximumf %29, %30 : vector<1x8x128xf32>
    %32 = arith.subf %28, %31 : vector<1x8x128xf32>
    %cst_17 = arith.constant 0.000000e+00 : f32
    %33 = vector.broadcast %cst_17 : f32 to vector<1x8x128xf32>
    %34 = arith.maximumf %32, %33 : vector<1x8x128xf32>
    %35 = vector.broadcast %2 : vector<1x8x1xf32> to vector<1x8x128xf32>
    %36 = vector.broadcast %4 : vector<1x1x128xf32> to vector<1x8x128xf32>
    %37 = arith.addf %35, %36 : vector<1x8x128xf32>
    %38 = arith.subf %37, %34 : vector<1x8x128xf32>
    %39 = vector.broadcast %19 : vector<1x8x1xf32> to vector<1x8x128xf32>
    %40 = vector.broadcast %25 : vector<1x1x128xf32> to vector<1x8x128xf32>
    %41 = arith.maximumf %39, %40 : vector<1x8x128xf32>
    %42 = vector.broadcast %16 : vector<1x8x1xf32> to vector<1x8x128xf32>
    %43 = vector.broadcast %22 : vector<1x1x128xf32> to vector<1x8x128xf32>
    %44 = arith.minimumf %42, %43 : vector<1x8x128xf32>
    %45 = arith.subf %41, %44 : vector<1x8x128xf32>
    %cst_18 = arith.constant 9.99999997E-7 : f32
    %46 = vector.broadcast %cst_18 : f32 to vector<1x8x128xf32>
    %47 = arith.addf %38, %46 : vector<1x8x128xf32>
    %48 = tpu.reciprocal %47 {approx = true} : vector<1x8x128xf32> -> vector<1x8x128xf32>
    %cst_19 = arith.constant 9.99999997E-7 : f32
    %49 = vector.broadcast %cst_19 : f32 to vector<1x8x128xf32>
    %50 = arith.addf %45, %49 : vector<1x8x128xf32>
    %51 = tpu.reciprocal %50 {approx = true} : vector<1x8x128xf32> -> vector<1x8x128xf32>
    %52 = arith.mulf %34, %48 : vector<1x8x128xf32>
    %53 = arith.subf %45, %38 : vector<1x8x128xf32>
    %54 = arith.mulf %53, %51 : vector<1x8x128xf32>
    %55 = arith.subf %52, %54 : vector<1x8x128xf32>
    %cst_20 = arith.constant 1.000000e+00 : f32
    %56 = vector.broadcast %cst_20 : f32 to vector<1x8x128xf32>
    %57 = arith.mulf %56, %13 : vector<1x8x128xf32>
    %cst_21 = arith.constant -1.000000e+00 : f32
    %58 = vector.broadcast %cst_21 : f32 to vector<1x8x128xf32>
    %59 = arith.mulf %58, %55 : vector<1x8x128xf32>
    %60 = arith.addf %57, %59 : vector<1x8x128xf32>
    %61 = vector.broadcast %0 : vector<1x8x1xf32> to vector<1x8x128xf32>
    %62 = arith.addf %60, %61 : vector<1x8x128xf32>
    %c0_22 = arith.constant 0 : index
    %c0_23 = arith.constant 0 : index
    %c0_24 = arith.constant 0 : index
    %63 = vector.load %arg7[%c0_22, %c0_23, %c0_24] : memref<1x8x128xf32, #tpu.memory_space<vmem>>, vector<1x8x128xf32>
    tpu.vector_store %arg7[%c0_22, %c0_23, %c0_24], %62 {strides = array<i32>} : memref<1x8x128xf32, #tpu.memory_space<vmem>>, vector<1x8x128xf32>,
    return
  }
  func.func @transform_0(%arg0: i32, %arg1: i32) -> (i32, i32, i32) {
    %c0_i32 = arith.constant 0 : i32
    %c0_i32_0 = arith.constant 0 : i32
    return %arg0, %arg1, %c0_i32 : i32, i32, i32
  }
  func.func @transform_1(%arg0: i32, %arg1: i32) -> (i32, i32, i32) {
    %c0_i32 = arith.constant 0 : i32
    %c0_i32_0 = arith.constant 0 : i32
    return %arg0, %arg1, %c0_i32 : i32, i32, i32
  }
  func.func @transform_2(%arg0: i32, %arg1: i32) -> (i32, i32, i32) {
    %c0_i32 = arith.constant 0 : i32
    %c0_i32_0 = arith.constant 0 : i32
    return %arg0, %arg1, %c0_i32 : i32, i32, i32
  }
  func.func @transform_3(%arg0: i32, %arg1: i32) -> (i32, i32, i32) {
    %c0_i32 = arith.constant 0 : i32
    %c0_i32_0 = arith.constant 0 : i32
    %c0_i32_1 = arith.constant 0 : i32
    return %arg0, %c0_i32, %c0_i32_0 : i32, i32, i32
  }
  func.func @transform_4(%arg0: i32, %arg1: i32) -> (i32, i32, i32) {
    %c0_i32 = arith.constant 0 : i32
    %c0_i32_0 = arith.constant 0 : i32
    %c0_i32_1 = arith.constant 0 : i32
    return %arg0, %c0_i32, %c0_i32_0 : i32, i32, i32
  }
  func.func @transform_5(%arg0: i32, %arg1: i32) -> (i32, i32, i32) {
    %c0_i32 = arith.constant 0 : i32
    %c0_i32_0 = arith.constant 0 : i32
    return %arg0, %arg1, %c0_i32 : i32, i32, i32
  }
}

</mosaic_0001>

<llo_original>
// kernel: tpu_custom_call.1
$region0: #{tpu_custom_call.1}
  #allocation0 [shape = 'u32[]', space=smem, size = 0x4, offset = 0x4, fixed_abs, tag = 'smem constant byte address 0x4 - core index']
  #allocation1 [shape = 'u32[144,128]{1,0:T(1,128)}', space=vmem, size = 0x12000, scoped, tag = 'internal scratch']
  %s0 = inlined_call_operand.vmem [shape: f32[2,8,1], index: 0, kind: input, shape index: {}]
  %s1 = inlined_call_operand.vmem [shape: f32[2,8,1], index: 1, kind: input, shape index: {}]
  %s2 = inlined_call_operand.vmem [shape: f32[2,8,1], index: 2, kind: input, shape index: {}]
  %s3 = inlined_call_operand.vmem [shape: f32[2,1,128], index: 3, kind: input, shape index: {}]
  %s4 = inlined_call_operand.vmem [shape: f32[2,1,128], index: 4, kind: input, shape index: {}]
  %s5 = inlined_call_operand.hbm [shape: f32[2,8,128], index: 5, kind: output, shape index: {}]
  %s6 = sld [smem:[#allocation0]]
  $region53: #{tpu_custom_call.1} parent=0
    _
  %s8 = ssub.s32 1, %s6
  %s9 = scalar_select 0, %s8, %s6
  $region1: #{tpu_custom_call.1} parent=0
    #allocation2 [shape = 'u8[8192]{0}', space=vmem, size = 0x2000, scoped, tag = 'output window, operand 0']
    #allocation3 [shape = 's32[2]{0}', space=sflag, size = 0x8, scoped, tag = 'scoped memory for tpu_custom_call.1']
    %10 = vsyncpa [#allocation3], 0
    %s11 = scalar_lea.sflag [#allocation3], 1
    %12 = vsyncpa %s11, 0
    loop: start=0, step=1, limit=4
    $region2: #{tpu_custom_call.1} parent=1 // loop_pre_header
      _
    $region3: #{tpu_custom_call.1} parent=1 // loop_header
      %s14 = sphi 0, %s18
      %p15 = scmp.ge.s32.totalorder %s14, 4
      %s21 = sphi 0, %s33
      %s22 = sphi 0, %s29
      %s23 = sphi 0, %s21
      %s24 = sphi 0, %s22
      %s25 = sphi 0, %s23
      %s26 = sphi 0, %s24
      %s38 = sphi 0, %s40
      %s41 = sphi 0, %s38
      %s42 = sphi 0, %s41
      %s58 = sphi 0, %s42
      %s66 = sphi 0, %s68
      %s69 = sphi 0, %s66
      %s70 = sphi 0, %s69
      %s86 = sphi 0, %s70
      %s94 = sphi 0, %s96
      %s97 = sphi 0, %s94
      %s98 = sphi 0, %s97
      %s114 = sphi 0, %s98
      %s120 = sphi 0, %s122
      %s123 = sphi 0, %s120
      %s124 = sphi 0, %s123
      %s140 = sphi 0, %s124
      %s146 = sphi 0, %s148
      %s149 = sphi 0, %s146
      %s150 = sphi 0, %s149
      %s166 = sphi 0, %s150
      %s174 = sphi 0, %s176
      %s177 = sphi 0, %s174
      %s178 = sphi 0, %s177
      %s194 = sphi 0, %s178
    $region4: #{tpu_custom_call.1} parent=1 // loop_header_branch
      %17 = sbr.rel (%p15) target = $region8
    $region5: #{tpu_custom_call.1} parent=1 // loop_body
      %s19 = ssub.s32 %s14, 1
      %s20 = ssub.s32 %s14, 2
      %s27 = sadd.s32 1, %s22
      %p28 = scmp.ge.s32.totalorder %s27, 1
      %s29 = scalar_select %p28, 0, %s27
      %s30 = sadd.s32 1, %s21
      %s31 = scalar_select %p28, %s30, %s21
      %p32 = scmp.ge.s32.totalorder %s31, 2
      %s33 = scalar_select %p32, 0, %s31
      %s34 = ssub.s32 %s21, %s33
      %s35 = ssub.s32 %s22, %s29
      %s36 = sor.u32 %s34, %s35
      %p37 = scmp.eq.s32.totalorder %s36, 0
      %s39 = sadd.s32 %s38, 1
      %s40 = scalar_select %p37, %s38, %s39
      %p43 = pneg %p37
      %p44 = scmp.eq.s32.totalorder %s14, 1
      %p45 = por %p43, %p44
      %p46 = scmp.ne.s32.totalorder %s38, %s41
      %p47 = scmp.eq.s32.totalorder %s14, 0
      %p48 = por %p46, %p47
      %p49 = scmp.ne.s32.totalorder %s38, %s41
      %p50 = scmp.eq.s32.totalorder %s19, 1
      %p51 = por %p49, %p50
      %p52 = scmp.ne.s32.totalorder %s41, %s42
      %p53 = scmp.eq.s32.totalorder %s19, 0
      %p54 = por %p52, %p53
      %p55 = scmp.ne.s32.totalorder %s41, %s42
      %p56 = scmp.eq.s32.totalorder %s20, 1
      %p57 = por %p55, %p56
      %p59 = scmp.ne.s32.totalorder %s42, %s58
      %p60 = scmp.eq.s32.totalorder %s20, 0
      %p61 = por %p59, %p60
      %s62 = ssub.s32 %s21, %s33
      %s63 = ssub.s32 %s22, %s29
      %s64 = sor.u32 %s62, %s63
      %p65 = scmp.eq.s32.totalorder %s64, 0
      %s67 = sadd.s32 %s66, 1
      %s68 = scalar_select %p65, %s66, %s67
      %p71 = pneg %p65
      %p72 = scmp.eq.s32.totalorder %s14, 1
      %p73 = por %p71, %p72
      %p74 = scmp.ne.s32.totalorder %s66, %s69
      %p75 = scmp.eq.s32.totalorder %s14, 0
      %p76 = por %p74, %p75
      %p77 = scmp.ne.s32.totalorder %s66, %s69
      %p78 = scmp.eq.s32.totalorder %s19, 1
      %p79 = por %p77, %p78
      %p80 = scmp.ne.s32.totalorder %s69, %s70
      %p81 = scmp.eq.s32.totalorder %s19, 0
      %p82 = por %p80, %p81
      %p83 = scmp.ne.s32.totalorder %s69, %s70
      %p84 = scmp.eq.s32.totalorder %s20, 1
      %p85 = por %p83, %p84
      %p87 = scmp.ne.s32.totalorder %s70, %s86
      %p88 = scmp.eq.s32.totalorder %s20, 0
      %p89 = por %p87, %p88
      %s90 = ssub.s32 %s21, %s33
      %s91 = ssub.s32 %s22, %s29
      %s92 = sor.u32 %s90, %s91
      %p93 = scmp.eq.s32.totalorder %s92, 0
      %s95 = sadd.s32 %s94, 1
      %s96 = scalar_select %p93, %s94, %s95
      %p99 = pneg %p93
      %p100 = scmp.eq.s32.totalorder %s14, 1
      %p101 = por %p99, %p100
      %p102 = scmp.ne.s32.totalorder %s94, %s97
      %p103 = scmp.eq.s32.totalorder %s14, 0
      %p104 = por %p102, %p103
      %p105 = scmp.ne.s32.totalorder %s94, %s97
      %p106 = scmp.eq.s32.totalorder %s19, 1
      %p107 = por %p105, %p106
      %p108 = scmp.ne.s32.totalorder %s97, %s98
      %p109 = scmp.eq.s32.totalorder %s19, 0
      %p110 = por %p108, %p109
      %p111 = scmp.ne.s32.totalorder %s97, %s98
      %p112 = scmp.eq.s32.totalorder %s20, 1
      %p113 = por %p111, %p112
      %p115 = scmp.ne.s32.totalorder %s98, %s114
      %p116 = scmp.eq.s32.totalorder %s20, 0
      %p117 = por %p115, %p116
      %s118 = ssub.s32 %s21, %s33
      %p119 = scmp.eq.s32.totalorder %s118, 0
      %s121 = sadd.s32 %s120, 1
      %s122 = scalar_select %p119, %s120, %s121
      %p125 = pneg %p119
      %p126 = scmp.eq.s32.totalorder %s14, 1
      %p127 = por %p125, %p126
      %p128 = scmp.ne.s32.totalorder %s120, %s123
      %p129 = scmp.eq.s32.totalorder %s14, 0
      %p130 = por %p128, %p129
      %p131 = scmp.ne.s32.totalorder %s120, %s123
      %p132 = scmp.eq.s32.totalorder %s19, 1
      %p133 = por %p131, %p132
      %p134 = scmp.ne.s32.totalorder %s123, %s124
      %p135 = scmp.eq.s32.totalorder %s19, 0
      %p136 = por %p134, %p135
      %p137 = scmp.ne.s32.totalorder %s123, %s124
      %p138 = scmp.eq.s32.totalorder %s20, 1
      %p139 = por %p137, %p138
      %p141 = scmp.ne.s32.totalorder %s124, %s140
      %p142 = scmp.eq.s32.totalorder %s20, 0
      %p143 = por %p141, %p142
      %s144 = ssub.s32 %s21, %s33
      %p145 = scmp.eq.s32.totalorder %s144, 0
      %s147 = sadd.s32 %s146, 1
      %s148 = scalar_select %p145, %s146, %s147
      %p151 = pneg %p145
      %p152 = scmp.eq.s32.totalorder %s14, 1
      %p153 = por %p151, %p152
      %p154 = scmp.ne.s32.totalorder %s146, %s149
      %p155 = scmp.eq.s32.totalorder %s14, 0
      %p156 = por %p154, %p155
      %p157 = scmp.ne.s32.totalorder %s146, %s149
      %p158 = scmp.eq.s32.totalorder %s19, 1
      %p159 = por %p157, %p158
      %p160 = scmp.ne.s32.totalorder %s149, %s150
      %p161 = scmp.eq.s32.totalorder %s19, 0
      %p162 = por %p160, %p161
      %p163 = scmp.ne.s32.totalorder %s149, %s150
      %p164 = scmp.eq.s32.totalorder %s20, 1
      %p165 = por %p163, %p164
      %p167 = scmp.ne.s32.totalorder %s150, %s166
      %p168 = scmp.eq.s32.totalorder %s20, 0
      %p169 = por %p167, %p168
      %s170 = ssub.s32 %s21, %s33
      %s171 = ssub.s32 %s22, %s29
      %s172 = sor.u32 %s170, %s171
      %p173 = scmp.eq.s32.totalorder %s172, 0
      %s175 = sadd.s32 %s174, 1
      %s176 = scalar_select %p173, %s174, %s175
      %p179 = pneg %p173
      %p180 = scmp.eq.s32.totalorder %s14, 1
      %p181 = por %p179, %p180
      %p182 = scmp.ne.s32.totalorder %s174, %s177
      %p183 = scmp.eq.s32.totalorder %s14, 0
      %p184 = por %p182, %p183
      %p185 = scmp.ne.s32.totalorder %s174, %s177
      %p186 = scmp.eq.s32.totalorder %s19, 1
      %p187 = por %p185, %p186
      %p188 = scmp.ne.s32.totalorder %s177, %s178
      %p189 = scmp.eq.s32.totalorder %s19, 0
      %p190 = por %p188, %p189
      %p191 = scmp.ne.s32.totalorder %s177, %s178
      %p192 = scmp.eq.s32.totalorder %s20, 1
      %p193 = por %p191, %p192
      %p195 = scmp.ne.s32.totalorder %s178, %s194
      %p196 = scmp.eq.s32.totalorder %s20, 0
      %p197 = por %p195, %p196
      %p198 = scmp.le.s32.totalorder 1, %s14
      %p199 = scmp.lt.s32.totalorder %s14, 3
      %p200 = pnand %p198, %p199
      %p201 = pneg %p200
      // Predicated region
      $region9: #{tpu_custom_call.1} parent=5 // pred_check
        _
      $region10: #{tpu_custom_call.1} parent=5 // pred_check_branch
        %203 = sbr.rel (%p200) target = $region12
      $region11: #{tpu_custom_call.1} parent=5 // pred_region
        %s204 = ssub.s32 %s14, 1
      $region12: #{tpu_custom_call.1} parent=5 // pred_fallthru
        _
      %p205 = scmp.lt.s32.totalorder %s14, 2
      // Predicated region
      $region13: #{tpu_custom_call.1} parent=5 // pred_check
        %p206 = pneg %p205
      $region14: #{tpu_custom_call.1} parent=5 // pred_check_branch
        %208 = sbr.rel (%p206) target = $region16
      $region15: #{tpu_custom_call.1} parent=5 // pred_region
        // Predicated region
        $region17: #{tpu_custom_call.1} parent=15 // pred_check
          %p209 = pneg %p48
        $region18: #{tpu_custom_call.1} parent=15 // pred_check_branch
          %211 = sbr.rel (%p209) target = $region20
        $region19: #{tpu_custom_call.1} parent=15 // pred_region
          %p212 = scmp.lt.s32.totalorder %s21, 1
          %s213 = scalar_select %p212, %s21, 1
          %p214 = scmp.lt.s32.totalorder %s22, 0
          %s215 = scalar_select %p214, %s22, 0
          %s216 = sadd.s32 %s215, %s213
          %s217 = smul.addr %s216, 8
          %s218 = scalar_lea.vmem %s0, %s217
        $region20: #{tpu_custom_call.1} parent=15 // pred_fallthru
          _
        // Predicated region
        $region21: #{tpu_custom_call.1} parent=15 // pred_check
          %p219 = pneg %p76
        $region22: #{tpu_custom_call.1} parent=15 // pred_check_branch
          %221 = sbr.rel (%p219) target = $region24
        $region23: #{tpu_custom_call.1} parent=15 // pred_region
          %p222 = scmp.lt.s32.totalorder %s21, 1
          %s223 = scalar_select %p222, %s21, 1
          %p224 = scmp.lt.s32.totalorder %s22, 0
          %s225 = scalar_select %p224, %s22, 0
          %s226 = sadd.s32 %s225, %s223
          %s227 = smul.addr %s226, 8
          %s228 = scalar_lea.vmem %s1, %s227
        $region24: #{tpu_custom_call.1} parent=15 // pred_fallthru
          _
        // Predicated region
        $region25: #{tpu_custom_call.1} parent=15 // pred_check
          %p229 = pneg %p104
        $region26: #{tpu_custom_call.1} parent=15 // pred_check_branch
          %231 = sbr.rel (%p229) target = $region28
        $region27: #{tpu_custom_call.1} parent=15 // pred_region
          %p232 = scmp.lt.s32.totalorder %s21, 1
          %s233 = scalar_select %p232, %s21, 1
          %p234 = scmp.lt.s32.totalorder %s22, 0
          %s235 = scalar_select %p234, %s22, 0
          %s236 = sadd.s32 %s235, %s233
          %s237 = smul.addr %s236, 8
          %s238 = scalar_lea.vmem %s2, %s237
        $region28: #{tpu_custom_call.1} parent=15 // pred_fallthru
          _
        // Predicated region
        $region29: #{tpu_custom_call.1} parent=15 // pred_check
          %p239 = pneg %p130
        $region30: #{tpu_custom_call.1} parent=15 // pred_check_branch
          %241 = sbr.rel (%p239) target = $region32
        $region31: #{tpu_custom_call.1} parent=15 // pred_region
          %p242 = scmp.lt.s32.totalorder %s21, 1
          %s243 = scalar_select %p242, %s21, 1
          %s244 = scalar_lea.vmem %s3, %s243
        $region32: #{tpu_custom_call.1} parent=15 // pred_fallthru
          _
        // Predicated region
        $region33: #{tpu_custom_call.1} parent=15 // pred_check
          %p245 = pneg %p156
        $region34: #{tpu_custom_call.1} parent=15 // pred_check_branch
          %247 = sbr.rel (%p245) target = $region36
        $region35: #{tpu_custom_call.1} parent=15 // pred_region
          %p248 = scmp.lt.s32.totalorder %s21, 1
          %s249 = scalar_select %p248, %s21, 1
          %s250 = scalar_lea.vmem %s4, %s249
        $region36: #{tpu_custom_call.1} parent=15 // pred_fallthru
          _
      $region16: #{tpu_custom_call.1} parent=5 // pred_fallthru
        _
      %p251 = scmp.le.s32.totalorder 1, %s14
      %p252 = scmp.lt.s32.totalorder %s14, 3
      %p253 = pnand %p251, %p252
      %p254 = pneg %p253
      // Predicated region
      $region37: #{tpu_custom_call.1} parent=5 // pred_check
        _
      $region38: #{tpu_custom_call.1} parent=5 // pred_check_branch
        %256 = sbr.rel (%p253) target = $region40
      $region39: #{tpu_custom_call.1} parent=5 // pred_region
        %s257 = ssub.s32 %s14, 1
        %p258 = scmp.lt.s32.totalorder %s23, 1
        %s259 = scalar_select %p258, %s23, 1
        %p260 = scmp.lt.s32.totalorder %s24, 0
        %s261 = scalar_select %p260, %s24, 0
        %s262 = sadd.s32 %s261, %s259
        %s263 = smul.addr %s262, 8
        %s264 = scalar_lea.vmem %s0, %s263
        %p265 = pneg %p54
        %p266 = pneg %p51
        %p267 = scmp.lt.s32.totalorder %s23, 1
        %s268 = scalar_select %p267, %s23, 1
        %p269 = scmp.lt.s32.totalorder %s24, 0
        %s270 = scalar_select %p269, %s24, 0
        %s271 = sadd.s32 %s270, %s268
        %s272 = smul.addr %s271, 8
        %s273 = scalar_lea.vmem %s1, %s272
        %p274 = pneg %p82
        %p275 = pneg %p79
        %p276 = scmp.lt.s32.totalorder %s23, 1
        %s277 = scalar_select %p276, %s23, 1
        %p278 = scmp.lt.s32.totalorder %s24, 0
        %s279 = scalar_select %p278, %s24, 0
        %s280 = sadd.s32 %s279, %s277
        %s281 = smul.addr %s280, 8
        %s282 = scalar_lea.vmem %s2, %s281
        %p283 = pneg %p110
        %p284 = pneg %p107
        %p285 = scmp.lt.s32.totalorder %s23, 1
        %s286 = scalar_select %p285, %s23, 1
        %s287 = scalar_lea.vmem %s3, %s286
        %p288 = pneg %p136
        %p289 = pneg %p133
        %p290 = scmp.lt.s32.totalorder %s23, 1
        %s291 = scalar_select %p290, %s23, 1
        %s292 = scalar_lea.vmem %s4, %s291
        %p293 = pneg %p162
        %p294 = pneg %p159
        %p295 = pneg %p190
        %p296 = pneg %p187
        %s297 = sand.u32 %s177, 1
        %s298 = scalar_lea.sflag [#allocation3], %s297
        %s299 = sand.u32 %s177, 1
        %s300 = smul.addr %s299, 8
        %s301 = scalar_lea.vmem [#allocation2], %s300
        %p302 = scmp.lt.s32.totalorder %s23, 1
        %s303 = scalar_select %p302, %s23, 1
        %p304 = scmp.lt.s32.totalorder %s24, 0
        %s305 = scalar_select %p304, %s24, 0
        %s306 = sadd.s32 %s305, %s303
        %s307 = smul.addr %s306, 8
        %s308 = scalar_lea.vmem %s0, %s307
        %p309 = scmp.lt.s32.totalorder %s23, 1
        %s310 = scalar_select %p309, %s23, 1
        %p311 = scmp.lt.s32.totalorder %s24, 0
        %s312 = scalar_select %p311, %s24, 0
        %s313 = sadd.s32 %s312, %s310
        %s314 = smul.addr %s313, 8
        %s315 = scalar_lea.vmem %s1, %s314
        %p316 = scmp.lt.s32.totalorder %s23, 1
        %s317 = scalar_select %p316, %s23, 1
        %p318 = scmp.lt.s32.totalorder %s24, 0
        %s319 = scalar_select %p318, %s24, 0
        %s320 = sadd.s32 %s319, %s317
        %s321 = smul.addr %s320, 8
        %s322 = scalar_lea.vmem %s2, %s321
        %p323 = scmp.lt.s32.totalorder %s23, 1
        %s324 = scalar_select %p323, %s23, 1
        %s325 = scalar_lea.vmem %s3, %s324
        %p326 = scmp.lt.s32.totalorder %s23, 1
        %s327 = scalar_select %p326, %s23, 1
        %s328 = scalar_lea.vmem %s4, %s327
        %v329 = vld [vmem:[%s308] sm:$0xff]
        %v330 = vld [vmem:[%s315] sm:$0xff]
        %v331 = vld [vmem:[%s322] sm:$0xff]
        %v332 = vld [vmem:[%s325] sm:$0x1]
        %v333 = vld [vmem:[%s328] sm:$0x1]
        %335 = vset.pattern.permute.xlu0 0
        %336 = vperm.xlu0 %335, %v330
        %v337 = vpop.permute.xlu0 %336
        %v340 = vlaneseq
        %v341 = vshrl.u32 %v340, 7
        %v342 = vsub.s32 0, %v341
        %v343 = vrot.slane %v332, %v342
        %v345 = vsub.f32 %v337, %v343
        %v346 = vand.u32 2147483647, %v345
        %348 = vset.pattern.permute.xlu0 0
        %349 = vperm.xlu0 %348, %v331
        %v350 = vpop.permute.xlu0 %349
        %v353 = vlaneseq
        %v354 = vshrl.u32 %v353, 7
        %v355 = vsub.s32 0, %v354
        %v356 = vrot.slane %v333, %v355
        %v358 = vsub.f32 %v350, %v356
        %v359 = vand.u32 2147483647, %v358
        %v360 = vadd.f32 %v346, %v359
        %v361 = vmul.f32 %v331, 0.5
        %v362 = vsub.f32 %v330, %v361
        %v363 = vadd.f32 %v330, %v361
        %v364 = vmul.f32 %v333, 0.5
        %v365 = vsub.f32 %v332, %v364
        %v366 = vadd.f32 %v332, %v364
        %368 = vset.pattern.permute.xlu0 0
        %369 = vperm.xlu0 %368, %v363
        %v370 = vpop.permute.xlu0 %369
        %v373 = vlaneseq
        %v374 = vshrl.u32 %v373, 7
        %v375 = vsub.s32 0, %v374
        %v376 = vrot.slane %v366, %v375
        %v378 = vmin.f32 %v370, %v376
        %380 = vset.pattern.permute.xlu0 0
        %381 = vperm.xlu0 %380, %v362
        %v382 = vpop.permute.xlu0 %381
        %v385 = vlaneseq
        %v386 = vshrl.u32 %v385, 7
        %v387 = vsub.s32 0, %v386
        %v388 = vrot.slane %v365, %v387
        %v390 = vmax.f32 %v382, %v388
        %v391 = vsub.f32 %v378, %v390
        %v392 = vmax.f32 %v391, 0.0
        %v393 = vadd.f32 %v350, %v356
        %v394 = vsub.f32 %v393, %v392
        %v395 = vmax.f32 %v370, %v376
        %v396 = vmin.f32 %v382, %v388
        %v397 = vsub.f32 %v395, %v396
        %v398 = vadd.f32 %v394, 1e-06
        %v399 = vrcp.pop %v398
        %v400 = vadd.f32 %v397, 1e-06
        %v401 = vrcp.pop %v400
        %v402 = vmul.f32 %v392, %v399
        %v403 = vsub.f32 %v397, %v394
        %v404 = vmul.f32 %v403, %v401
        %v405 = vsub.f32 %v402, %v404
        %v406 = vmul.f32 %v405, -1.0
        %v407 = vadd.f32 %v360, %v406
        %409 = vset.pattern.permute.xlu0 0
        %410 = vperm.xlu0 %409, %v329
        %v411 = vpop.permute.xlu0 %410
        %v413 = vadd.f32 %v407, %v411
        %414 = vst [vmem:[%s301] sm:$0xff] %v413
        %s415 = sand.u32 %s177, 1
        %s416 = scalar_lea.sflag [#allocation3], %s415
        %s417 = sand.u32 %s177, 1
        %s418 = smul.addr %s417, 8
        %s419 = scalar_lea.vmem [#allocation2], %s418
        // Predicated region
        $region41: #{tpu_custom_call.1} parent=39 // pred_check
          %p420 = pneg %p187
        $region42: #{tpu_custom_call.1} parent=39 // pred_check_branch
          %422 = sbr.rel (%p420) target = $region44
        $region43: #{tpu_custom_call.1} parent=39 // pred_region
          %s424 = ssub.s32 128, 128
          %425 = vsyncadd %s416, %s424
          %s426 = sadd.s32 %s24, %s23
          %s427 = smul.addr %s426, 128
          %s428 = scalar_lea.hbm %s5, %s427
          %s430 = sshll.u32 %s419, 4
          %s431 = int_to_ptr.vmem [resolvable:$true] %s430
          %433 = dma.vmem_to_hbm [thread:$0]  %s431, 128, %s428, %s416
        $region44: #{tpu_custom_call.1} parent=39 // pred_fallthru
          _
      $region40: #{tpu_custom_call.1} parent=5 // pred_fallthru
        _
      %p434 = scmp.le.s32.totalorder 2, %s14
      // Predicated region
      $region45: #{tpu_custom_call.1} parent=5 // pred_check
        %p435 = pneg %p434
      $region46: #{tpu_custom_call.1} parent=5 // pred_check_branch
        %437 = sbr.rel (%p435) target = $region48
      $region47: #{tpu_custom_call.1} parent=5 // pred_region
        %s438 = ssub.s32 %s14, 2
        // Predicated region
        $region49: #{tpu_custom_call.1} parent=47 // pred_check
          %p439 = pneg %p193
        $region50: #{tpu_custom_call.1} parent=47 // pred_check_branch
          %441 = sbr.rel (%p439) target = $region52
        $region51: #{tpu_custom_call.1} parent=47 // pred_region
          %s442 = sand.u32 %s178, 1
          %s443 = scalar_lea.sflag [#allocation3], %s442
          %s444 = sand.u32 %s178, 1
          %s445 = smul.addr %s444, 8
          %s446 = scalar_lea.vmem [#allocation2], %s445
          %447 = dma.done %s443, 128
        $region52: #{tpu_custom_call.1} parent=47 // pred_fallthru
          _
      $region48: #{tpu_custom_call.1} parent=5 // pred_fallthru
        _
    $region6: #{tpu_custom_call.1} parent=1 // loop_footer
      %s18 = sadd.s32 1, %s14
    $region7: #{tpu_custom_call.1} parent=1 // loop_footer_branch
      %13 = sbr.rel target = $region3
    $region8: #{tpu_custom_call.1} parent=1 // loop_exit
      _
    %448 = vsyncpa [#allocation3], 1
    %s449 = scalar_lea.sflag [#allocation3], 1
    %450 = vsyncpa %s449, 1

</llo_original>
